<compile_context>
chip_gen: v7x
topology: tpu7x:2x2x1
jax: 0.10.0
libtpu: 0.0.40
codegen_flags: <defaults>
</compile_context>

<pallas_src>
import functools

import jax
import jax.numpy as jnp
from jax.experimental import pallas as pl
from jax.experimental.pallas import tpu as pltpu


# ------------------------------ tiling helpers ------------------------------

_VMEM_LIMIT = 48 * 1024 * 1024   # safe on v5e/v6e (128 MiB) and v7x (64 MiB)
_TILE_M = 256                    # token-row tile target
_TILE_N = 512                    # output-lane tile target (multiple of 128)
_TILE_K = 512                    # reduction tile target (multiple of 128)


def _round_up(x, m):
    return (x + m - 1) // m * m


def _pick_tile(dim, target, align):
    """Largest multiple of `align` <= target that divides dim, else the full dim."""
    if dim <= target or dim % align != 0:
        return dim
    t = (target // align) * align
    while t >= align:
        if dim % t == 0:
            return t
        t -= align
    return dim


# ------------------------------ Pallas kernels ------------------------------

def _ln_linear_kernel(x_ref, g_ref, bln_ref, w_ref, b_ref, o_ref, *,
                      eps, activation, mxu_dtype):
    """y = act( LayerNorm(x) @ W + b ).  LN recomputed per N-tile (cheap VPU)."""
    x = x_ref[...]                                       # (tm, K) f32
    mu = jnp.mean(x, axis=-1, keepdims=True)
    var = jnp.mean(jnp.square(x - mu), axis=-1, keepdims=True)
    h = (x - mu) * jax.lax.rsqrt(var + eps) * g_ref[...] + bln_ref[...]
    y = jnp.dot(h.astype(mxu_dtype), w_ref[...],
                preferred_element_type=jnp.float32)
    y = y + b_ref[...]
    if activation == "relu":
        y = jnp.maximum(y, 0.0)
    o_ref[...] = y.astype(o_ref.dtype)


def ln_linear(x, g, bln, w, b, *, activation=None, eps=1e-5,
              mxu_dtype=jnp.float32):
    """Fused LayerNorm + Linear. x: (M, K), w: (K, N), g/bln: (1, K), b: (1, N)."""
    M, K = x.shape
    N = w.shape[1]
    tm = min(_TILE_M, _round_up(M, 8))
    gm = pl.cdiv(M, tm)
    m_pad = gm * tm
    if m_pad != M:
        x = jnp.pad(x, ((0, m_pad - M), (0, 0)))
    tn = _pick_tile(N, _TILE_N, 128)
    w = w.astype(mxu_dtype)

    cost = pl.CostEstimate(
        flops=2 * m_pad * K * N, transcendentals=0,
        bytes_accessed=4 * (m_pad * K + m_pad * N) + int(w.dtype.itemsize) * K * N)

    out = pl.pallas_call(
        functools.partial(_ln_linear_kernel, eps=eps, activation=activation,
                          mxu_dtype=mxu_dtype),
        out_shape=jax.ShapeDtypeStruct((m_pad, N), jnp.float32),
        grid_spec=pltpu.PrefetchScalarGridSpec(
            num_scalar_prefetch=0,
            grid=(gm, N // tn),
            in_specs=[
                pl.BlockSpec((tm, K), lambda i, j: (i, 0)),
                pl.BlockSpec((1, K), lambda i, j: (0, 0)),
                pl.BlockSpec((1, K), lambda i, j: (0, 0)),
                pl.BlockSpec((K, tn), lambda i, j: (0, j)),
                pl.BlockSpec((1, tn), lambda i, j: (0, j)),
            ],
            out_specs=pl.BlockSpec((tm, tn), lambda i, j: (i, j)),
        ),
        compiler_params=pltpu.CompilerParams(
            dimension_semantics=("parallel", "parallel"),
            vmem_limit_bytes=_VMEM_LIMIT),
        cost_estimate=cost,
    )(x, g, bln, w, b)
    return out[:M] if m_pad != M else out


def _linear_res_kernel(x_ref, w_ref, b_ref, r_ref, o_ref, acc_ref, *, mxu_dtype):
    """o = x @ W + b + residual, K-tiled with f32 accumulator."""
    k = pl.program_id(2)

    @pl.when(k == 0)
    def _():
        acc_ref[...] = jnp.zeros_like(acc_ref)

    acc_ref[...] += jnp.dot(x_ref[...].astype(mxu_dtype), w_ref[...],
                            preferred_element_type=jnp.float32)

    @pl.when(k == pl.num_programs(2) - 1)
    def _():
        o_ref[...] = (acc_ref[...] + b_ref[...] + r_ref[...]).astype(o_ref.dtype)


def linear_residual(x, w, b, res, *, mxu_dtype=jnp.float32):
    """Fused Linear + bias + residual add. x: (M, K), w: (K, N), res: (M, N)."""
    M, K = x.shape
    N = w.shape[1]
    tm = min(_TILE_M, _round_up(M, 8))
    gm = pl.cdiv(M, tm)
    m_pad = gm * tm
    if m_pad != M:
        x = jnp.pad(x, ((0, m_pad - M), (0, 0)))
        res = jnp.pad(res, ((0, m_pad - M), (0, 0)))
    tn = _pick_tile(N, _TILE_N, 128)
    tk = _pick_tile(K, _TILE_K, 128)
    w = w.astype(mxu_dtype)

    cost = pl.CostEstimate(
        flops=2 * m_pad * K * N, transcendentals=0,
        bytes_accessed=4 * (m_pad * K + 2 * m_pad * N) + int(w.dtype.itemsize) * K * N)

    out = pl.pallas_call(
        functools.partial(_linear_res_kernel, mxu_dtype=mxu_dtype),
        out_shape=jax.ShapeDtypeStruct((m_pad, N), jnp.float32),
        grid_spec=pltpu.PrefetchScalarGridSpec(
            num_scalar_prefetch=0,
            grid=(gm, N // tn, K // tk),
            in_specs=[
                pl.BlockSpec((tm, tk), lambda i, j, kk: (i, kk)),
                pl.BlockSpec((tk, tn), lambda i, j, kk: (kk, j)),
                pl.BlockSpec((1, tn), lambda i, j, kk: (0, j)),
                pl.BlockSpec((tm, tn), lambda i, j, kk: (i, j)),
            ],
            out_specs=pl.BlockSpec((tm, tn), lambda i, j, kk: (i, j)),
            scratch_shapes=[pltpu.VMEM((tm, tn), jnp.float32)],
        ),
        compiler_params=pltpu.CompilerParams(
            dimension_semantics=("parallel", "parallel", "arbitrary"),
            vmem_limit_bytes=_VMEM_LIMIT),
        cost_estimate=cost,
    )(x, w, b, res)
    return out[:M] if m_pad != M else out


def _layernorm_kernel(x_ref, g_ref, b_ref, o_ref, *, eps):
    x = x_ref[...]
    mu = jnp.mean(x, axis=-1, keepdims=True)
    var = jnp.mean(jnp.square(x - mu), axis=-1, keepdims=True)
    o_ref[...] = ((x - mu) * jax.lax.rsqrt(var + eps) * g_ref[...]
                  + b_ref[...]).astype(o_ref.dtype)


def layernorm(x, g, b, *, eps=1e-5):
    """Standalone LayerNorm (final encoder LN). x: (M, H), g/b: (1, H)."""
    M, H = x.shape
    tm = min(_TILE_M, _round_up(M, 8))
    gm = pl.cdiv(M, tm)
    m_pad = gm * tm
    if m_pad != M:
        x = jnp.pad(x, ((0, m_pad - M), (0, 0)))
    out = pl.pallas_call(
        functools.partial(_layernorm_kernel, eps=eps),
        out_shape=jax.ShapeDtypeStruct((m_pad, H), jnp.float32),
        grid_spec=pltpu.PrefetchScalarGridSpec(
            num_scalar_prefetch=0,
            grid=(gm,),
            in_specs=[
                pl.BlockSpec((tm, H), lambda i: (i, 0)),
                pl.BlockSpec((1, H), lambda i: (0, 0)),
                pl.BlockSpec((1, H), lambda i: (0, 0)),
            ],
            out_specs=pl.BlockSpec((tm, H), lambda i: (i, 0)),
        ),
        compiler_params=pltpu.CompilerParams(
            dimension_semantics=("parallel",),
            vmem_limit_bytes=_VMEM_LIMIT),
    )(x, g, b)
    return out[:M] if m_pad != M else out


def _flash_mha_kernel(q_ref, k_ref, v_ref, bias_ref, o_ref,
                      m_sc, l_sc, acc_sc, *, scale, mxu_dtype):
    """Flash attention: online softmax over KV tiles; mask as additive bias."""
    ki = pl.program_id(3)

    @pl.when(ki == 0)
    def _():
        m_sc[...] = jnp.full_like(m_sc, -1e30)
        l_sc[...] = jnp.zeros_like(l_sc)
        acc_sc[...] = jnp.zeros_like(acc_sc)

    q = q_ref[0, 0].astype(mxu_dtype)                    # (tq, Dh)
    k = k_ref[0, 0].astype(mxu_dtype)                    # (tk, Dh)
    s = jax.lax.dot_general(q, k, (((1,), (1,)), ((), ())),
                            preferred_element_type=jnp.float32) * scale
    s = s + bias_ref[0]                                  # (1, tk) broadcast

    m_prev = m_sc[...]
    m_new = jnp.maximum(m_prev, jnp.max(s, axis=-1, keepdims=True))
    alpha = jnp.exp(m_prev - m_new)
    p = jnp.exp(s - m_new)
    l_sc[...] = alpha * l_sc[...] + jnp.sum(p, axis=-1, keepdims=True)
    acc_sc[...] = alpha * acc_sc[...] + jnp.dot(
        p.astype(mxu_dtype), v_ref[0, 0].astype(mxu_dtype),
        preferred_element_type=jnp.float32)
    m_sc[...] = m_new

    @pl.when(ki == pl.num_programs(3) - 1)
    def _():
        o_ref[0, 0] = (acc_sc[...] *
                       pl.reciprocal(l_sc[...], approx=True)).astype(o_ref.dtype)


def flash_mha(q, k, v, bias, *, scale, mxu_dtype=jnp.float32):
    """q/k/v: (B, nH, S, Dh); bias: (B, 1, S) additive mask bias."""
    B, nH, S, Dh = q.shape
    tq = _pick_tile(S, 256, 8)
    tk = _pick_tile(S, 512, 128)
    qspec = pl.BlockSpec((1, 1, tq, Dh), lambda b, h, qi, ki: (b, h, qi, 0))
    kvspec = pl.BlockSpec((1, 1, tk, Dh), lambda b, h, qi, ki: (b, h, ki, 0))
    return pl.pallas_call(
        functools.partial(_flash_mha_kernel, scale=scale, mxu_dtype=mxu_dtype),
        out_shape=jax.ShapeDtypeStruct((B, nH, S, Dh), jnp.float32),
        grid_spec=pltpu.PrefetchScalarGridSpec(
            num_scalar_prefetch=0,
            grid=(B, nH, S // tq, S // tk),
            in_specs=[
                qspec, kvspec, kvspec,
                pl.BlockSpec((1, 1, tk), lambda b, h, qi, ki: (b, 0, ki)),
            ],
            out_specs=qspec,
            scratch_shapes=[
                pltpu.VMEM((tq, 1), jnp.float32),     # running max
                pltpu.VMEM((tq, 1), jnp.float32),     # running denom
                pltpu.VMEM((tq, Dh), jnp.float32),    # output accumulator
            ],
        ),
        compiler_params=pltpu.CompilerParams(
            dimension_semantics=("parallel", "parallel", "parallel", "arbitrary"),
            vmem_limit_bytes=_VMEM_LIMIT),
    )(q, k, v, bias)


# -------------------------------- model glue --------------------------------

def encoder_layer(p, x, bias, num_heads, mxu_dtype):
    B, S, H = x.shape
    Dh = H // num_heads
    M = B * S
    xf = x.reshape(M, H)

    # --- self-attention block: fused LN1 + QKV projection (one (H,3H) matmul)
    qkv = ln_linear(xf, p["ln1_g"], p["ln1_b"], p["wqkv"], p["bqkv"],
                    mxu_dtype=mxu_dtype)                             # (M, 3H)
    qkv = qkv.reshape(B, S, 3, num_heads, Dh).transpose(2, 0, 3, 1, 4)
    q, k, v = qkv[0], qkv[1], qkv[2]                                 # (B,nH,S,Dh)

    o = flash_mha(q, k, v, bias, scale=1.0 / (Dh ** 0.5), mxu_dtype=mxu_dtype)
    # TODO(synk): head-merge transpose kept in XLA glue; could be folded into
    # the output-projection BlockSpec for one fewer HBM copy per layer.
    o = o.transpose(0, 2, 1, 3).reshape(M, H)

    # fused output projection + bias + residual add
    xf = linear_residual(o, p["wo"], p["bo"], xf, mxu_dtype=mxu_dtype)

    # --- feed-forward block: fused LN2 + W1 + ReLU, then W2 + bias + residual
    f = ln_linear(xf, p["ln2_g"], p["ln2_b"], p["w1"], p["b1"],
                  activation="relu", mxu_dtype=mxu_dtype)
    xf = linear_residual(f, p["w2"], p["b2"], xf, mxu_dtype=mxu_dtype)
    return xf.reshape(B, S, H)


def encoder_forward(params, num_heads, input_ids, attention_mask, *,
                    mxu_dtype=jnp.float32):
    """Returns last_hidden_state of shape (B, S, H), float32."""
    B, S = input_ids.shape
    H = params["embed"].shape[1]
    # Embedding gather kept in plain JAX glue (not a matmul/reduction hot path).
    x = jnp.take(params["embed"], input_ids, axis=0)                 # (B, S, H)
    bias = ((1.0 - attention_mask.astype(jnp.float32)) * -1e9).reshape(B, 1, S)
    for p in params["layers"]:
        x = encoder_layer(p, x, bias, num_heads, mxu_dtype)
    xf = layernorm(x.reshape(B * S, H), params["final_g"], params["final_b"])
    return xf.reshape(B, S, H)


def init_params(key, vocab, H, ffn, n_layers):
    k_embed, *k_layers = jax.random.split(key, 1 + n_layers)
    params = {
        "embed": 0.02 * jax.random.normal(k_embed, (vocab, H), jnp.float32),
        "layers": [],
        "final_g": jnp.ones((1, H), jnp.float32),
        "final_b": jnp.zeros((1, H), jnp.float32),
    }
    for kl in k_layers:
        ks = jax.random.split(kl, 6)
        s = 0.05
        wq = s * jax.random.normal(ks[0], (H, H), jnp.float32)
        wk = s * jax.random.normal(ks[1], (H, H), jnp.float32)
        wv = s * jax.random.normal(ks[2], (H, H), jnp.float32)
        params["layers"].append({
            "ln1_g": jnp.ones((1, H), jnp.float32),
            "ln1_b": jnp.zeros((1, H), jnp.float32),
            "wqkv": jnp.concatenate([wq, wk, wv], axis=1),           # (H, 3H)
            "bqkv": jnp.zeros((1, 3 * H), jnp.float32),
            "wo": s * jax.random.normal(ks[3], (H, H), jnp.float32),
            "bo": jnp.zeros((1, H), jnp.float32),
            "ln2_g": jnp.ones((1, H), jnp.float32),
            "ln2_b": jnp.zeros((1, H), jnp.float32),
            "w1": s * jax.random.normal(ks[4], (H, ffn), jnp.float32),
            "b1": jnp.zeros((1, ffn), jnp.float32),
            "w2": s * jax.random.normal(ks[5], (ffn, H), jnp.float32),
            "b2": jnp.zeros((1, H), jnp.float32),
        })
    return params


# ----------------------------- pure-JAX reference ----------------------------

def ref_forward(params, num_heads, input_ids, attention_mask):
    B, S = input_ids.shape
    H = params["embed"].shape[1]
    Dh = H // num_heads
    x = jnp.take(params["embed"], input_ids, axis=0)
    bias = ((1.0 - attention_mask.astype(jnp.float32)) * -1e9).reshape(B, 1, 1, S)

    def ln(t, g, b):
        mu = jnp.mean(t, -1, keepdims=True)
        var = jnp.mean((t - mu) ** 2, -1, keepdims=True)
        return (t - mu) * jax.lax.rsqrt(var + 1e-5) * g + b

    for p in params["layers"]:
        h = ln(x, p["ln1_g"][0], p["ln1_b"][0])
        qkv = h @ p["wqkv"] + p["bqkv"][0]
        q, k, v = jnp.split(qkv, 3, axis=-1)
        q = q.reshape(B, S, num_heads, Dh).transpose(0, 2, 1, 3)
        k = k.reshape(B, S, num_heads, Dh).transpose(0, 2, 1, 3)
        v = v.reshape(B, S, num_heads, Dh).transpose(0, 2, 1, 3)
        s = jnp.einsum("bhqd,bhkd->bhqk", q, k) / (Dh ** 0.5) + bias
        a = jax.nn.softmax(s, axis=-1)
        o = jnp.einsum("bhqk,bhkd->bhqd", a, v).transpose(0, 2, 1, 3).reshape(B, S, H)
        x = x + o @ p["wo"] + p["bo"][0]
        h2 = ln(x, p["ln2_g"][0], p["ln2_b"][0])
        f = jnp.maximum(h2 @ p["w1"] + p["b1"][0], 0.0)
        x = x + f @ p["w2"] + p["b2"][0]
    return ln(x, params["final_g"][0], params["final_b"][0])


# ------------------------------------ main -----------------------------------

if __name__ == "__main__":
    # Small but lane-aligned demo shapes (H and FFN multiples of 128).
    B, S, H, NH, FFN, VOCAB, LAYERS = 2, 16, 128, 4, 256, 128, 2

    key = jax.random.PRNGKey(0)
    k_param, k_ids = jax.random.split(key)
    params = init_params(k_param, VOCAB, H, FFN, LAYERS)

    input_ids = jax.random.randint(k_ids, (B, S), 0, VOCAB, dtype=jnp.int32)
    lengths = jnp.array([[S], [S - 5]], dtype=jnp.int32)
    attention_mask = (jnp.arange(S)[None, :] < lengths).astype(jnp.int32)  # (B,S)

    ref = ref_forward(params, NH, input_ids, attention_mask)

    # f32 MXU path -- tight correctness check.
    out = jax.block_until_ready(
        encoder_forward(params, NH, input_ids, attention_mask,
                        mxu_dtype=jnp.float32))
    assert out.shape == (B, S, H) and out.dtype == jnp.float32
    assert jnp.max(jnp.abs(out - ref)) < 5e-2, "f32 mismatch vs pure-JAX reference"

    # bf16 MXU path (v6e/v7x production config) -- looser numerical check.
    out_bf16 = jax.block_until_ready(
        encoder_forward(params, NH, input_ids, attention_mask,
                        mxu_dtype=jnp.bfloat16))
    assert out_bf16.shape == (B, S, H)
    assert jnp.max(jnp.abs(out_bf16 - ref)) < 2e-1, "bf16 mismatch vs reference"

    print("KERNEL_OK")
</pallas_src>

<mosaic_0001>
module attributes {stable_mosaic.version = 11 : i64} {
  func.func @_ln_linear_kernel(%arg0: i32, %arg1: i32, %arg2: memref<32x128xf32, #tpu.memory_space<vmem>>, %arg3: memref<1x128xf32, #tpu.memory_space<vmem>>, %arg4: memref<1x128xf32, #tpu.memory_space<vmem>>, %arg5: memref<128x384xf32, #tpu.memory_space<vmem>>, %arg6: memref<1x384xf32, #tpu.memory_space<vmem>>, %arg7: memref<32x384xf32, #tpu.memory_space<vmem>>) attributes {dimension_semantics = [#tpu.dimension_semantics<parallel>, #tpu.dimension_semantics<parallel>], iteration_bounds = array<i64: 1, 1>, scalar_prefetch = 0 : i64, scratch_operands = 0 : i64, tpu.core_type = #tpu.core_type<tc>, window_params = [{transform_indices = @transform_0, window_bounds = array<i64: 32, 128>}, {pipeline_mode = #tpu.pipeline_mode<synchronous>, transform_indices = @transform_1, window_bounds = array<i64: 1, 128>}, {pipeline_mode = #tpu.pipeline_mode<synchronous>, transform_indices = @transform_2, window_bounds = array<i64: 1, 128>}, {transform_indices = @transform_3, window_bounds = array<i64: 128, 384>}, {transform_indices = @transform_4, window_bounds = array<i64: 1, 384>}, {transform_indices = @transform_5, window_bounds = array<i64: 32, 384>}]} {
    %c0 = arith.constant 0 : index
    %c0_0 = arith.constant 0 : index
    %0 = vector.load %arg2[%c0, %c0_0] : memref<32x128xf32, #tpu.memory_space<vmem>>, vector<32x128xf32>
    %cst = arith.constant dense<0.000000e+00> : vector<32xf32>
    %1 = vector.multi_reduction <add>, %0, %cst [1] : vector<32x128xf32> to vector<32xf32>
    %2 = vector.shape_cast %1 : vector<32xf32> to vector<32x1xf32>
    %cst_1 = arith.constant 1.280000e+02 : f32
    %3 = vector.broadcast %cst_1 : f32 to vector<32x1xf32>
    %4 = arith.divf %2, %3 : vector<32x1xf32>
    %5 = vector.broadcast %4 : vector<32x1xf32> to vector<32x128xf32>
    %6 = arith.subf %0, %5 : vector<32x128xf32>
    %7 = arith.mulf %6, %6 : vector<32x128xf32>
    %cst_2 = arith.constant dense<0.000000e+00> : vector<32xf32>
    %8 = vector.multi_reduction <add>, %7, %cst_2 [1] : vector<32x128xf32> to vector<32xf32>
    %9 = vector.shape_cast %8 : vector<32xf32> to vector<32x1xf32>
    %cst_3 = arith.constant 1.280000e+02 : f32
    %10 = vector.broadcast %cst_3 : f32 to vector<32x1xf32>
    %11 = arith.divf %9, %10 : vector<32x1xf32>
    %12 = vector.broadcast %4 : vector<32x1xf32> to vector<32x128xf32>
    %13 = arith.subf %0, %12 : vector<32x128xf32>
    %cst_4 = arith.constant 9.99999974E-6 : f32
    %14 = vector.broadcast %cst_4 : f32 to vector<32x1xf32>
    %15 = arith.addf %11, %14 : vector<32x1xf32>
    %16 = math.rsqrt %15 : vector<32x1xf32>
    %17 = vector.broadcast %16 : vector<32x1xf32> to vector<32x128xf32>
    %18 = arith.mulf %13, %17 : vector<32x128xf32>
    %c0_5 = arith.constant 0 : index
    %c0_6 = arith.constant 0 : index
    %19 = vector.load %arg3[%c0_5, %c0_6] : memref<1x128xf32, #tpu.memory_space<vmem>>, vector<1x128xf32>
    %20 = vector.broadcast %19 : vector<1x128xf32> to vector<32x128xf32>
    %21 = arith.mulf %18, %20 : vector<32x128xf32>
    %c0_7 = arith.constant 0 : index
    %c0_8 = arith.constant 0 : index
    %22 = vector.load %arg4[%c0_7, %c0_8] : memref<1x128xf32, #tpu.memory_space<vmem>>, vector<1x128xf32>
    %23 = vector.broadcast %22 : vector<1x128xf32> to vector<32x128xf32>
    %24 = arith.addf %21, %23 : vector<32x128xf32>
    %c0_9 = arith.constant 0 : index
    %c0_10 = arith.constant 0 : index
    %25 = vector.load %arg5[%c0_9, %c0_10] : memref<128x384xf32, #tpu.memory_space<vmem>>, vector<128x384xf32>
    %cst_11 = arith.constant dense<0.000000e+00> : vector<32x384xf32>
    %26 = tpu.matmul %24, %25, %cst_11 {dimension_numbers = #tpu.dot_dimension_numbers<[1], [0], [0], [1], [0, 0, 1, 1], [], []>} : vector<32x128xf32>, vector<128x384xf32>, vector<32x384xf32> -> vector<32x384xf32>
    %c0_12 = arith.constant 0 : index
    %c0_13 = arith.constant 0 : index
    %27 = vector.load %arg6[%c0_12, %c0_13] : memref<1x384xf32, #tpu.memory_space<vmem>>, vector<1x384xf32>
    %28 = vector.broadcast %27 : vector<1x384xf32> to vector<32x384xf32>
    %29 = arith.addf %26, %28 : vector<32x384xf32>
    %c0_14 = arith.constant 0 : index
    %c0_15 = arith.constant 0 : index
    %30 = vector.load %arg7[%c0_14, %c0_15] : memref<32x384xf32, #tpu.memory_space<vmem>>, vector<32x384xf32>
    tpu.vector_store %arg7[%c0_14, %c0_15], %29 {strides = array<i32>} : memref<32x384xf32, #tpu.memory_space<vmem>>, vector<32x384xf32>,
    return
  }
  func.func @transform_0(%arg0: i32, %arg1: i32) -> (i32, i32) {
    %c0_i32 = arith.constant 0 : i32
    %c0_i32_0 = arith.constant 0 : i32
    return %arg0, %c0_i32 : i32, i32
  }
  func.func @transform_1(%arg0: i32, %arg1: i32) -> (i32, i32) {
    %c0_i32 = arith.constant 0 : i32
    %c0_i32_0 = arith.constant 0 : i32
    %c0_i32_1 = arith.constant 0 : i32
    return %c0_i32, %c0_i32_0 : i32, i32
  }
  func.func @transform_2(%arg0: i32, %arg1: i32) -> (i32, i32) {
    %c0_i32 = arith.constant 0 : i32
    %c0_i32_0 = arith.constant 0 : i32
    %c0_i32_1 = arith.constant 0 : i32
    return %c0_i32, %c0_i32_0 : i32, i32
  }
  func.func @transform_3(%arg0: i32, %arg1: i32) -> (i32, i32) {
    %c0_i32 = arith.constant 0 : i32
    %c0_i32_0 = arith.constant 0 : i32
    return %c0_i32, %arg1 : i32, i32
  }
  func.func @transform_4(%arg0: i32, %arg1: i32) -> (i32, i32) {
    %c0_i32 = arith.constant 0 : i32
    %c0_i32_0 = arith.constant 0 : i32
    return %c0_i32, %arg1 : i32, i32
  }
  func.func @transform_5(%arg0: i32, %arg1: i32) -> (i32, i32) {
    %c0_i32 = arith.constant 0 : i32
    return %arg0, %arg1 : i32, i32
  }
}

</mosaic_0001>

<llo_original>
// kernel: tpu_custom_call.1
$region0: #{tpu_custom_call.1}
  #allocation0 [shape = 'u32[]', space=smem, size = 0x4, offset = 0x4, fixed_abs, tag = 'smem constant byte address 0x4 - core index']
  #allocation1 [shape = 'u32[144,128]{1,0:T(1,128)}', space=vmem, size = 0x12000, scoped, tag = 'internal scratch']
  %s0 = inlined_call_operand.hbm [shape: f32[32,128], index: 0, kind: input, shape index: {}]
  %s1 = inlined_call_operand.vmem [shape: f32[1,128], index: 1, kind: input, shape index: {}]
  %s2 = inlined_call_operand.vmem [shape: f32[1,128], index: 2, kind: input, shape index: {}]
  %s3 = inlined_call_operand.hbm [shape: f32[128,384], index: 3, kind: input, shape index: {}]
  %s4 = inlined_call_operand.vmem [shape: f32[1,384], index: 4, kind: input, shape index: {}]
  %s5 = inlined_call_operand.hbm [shape: f32[32,384], index: 5, kind: output, shape index: {}]
  %s6 = sld [smem:[#allocation0]]
  $region38: #{tpu_custom_call.1} parent=0
    _
  %s8 = ssub.s32 1, %s6
  %s9 = scalar_select 0, %s8, %s6
  $region1: #{tpu_custom_call.1} parent=0
    #allocation2 [shape = 'u8[16384]{0}', space=vmem, size = 0x4000, scoped, tag = 'input window, operand 0, single buffered']
    #allocation3 [shape = 's32[1]{0}', space=sflag, size = 0x4, scoped, tag = 'scoped memory for tpu_custom_call.1']
    #allocation4 [shape = 's32[1]{0}', space=sflag, size = 0x4, scoped, tag = 'scoped memory for tpu_custom_call.1']
    #allocation5 [shape = 'u8[196608]{0}', space=vmem, size = 0x30000, scoped, tag = 'input window, operand 3, single buffered']
    #allocation6 [shape = 's32[1]{0}', space=sflag, size = 0x4, scoped, tag = 'scoped memory for tpu_custom_call.1']
    #allocation7 [shape = 'u8[49152]{0}', space=vmem, size = 0xc000, scoped, tag = 'output window, operand 0, single buffered']
    %10 = vsyncpa [#allocation3], 0
    %11 = vsyncpa [#allocation6], 0
    %12 = vsyncpa [#allocation4], 0
    // Predicated region
    $region2: #{tpu_custom_call.1} parent=1 // pred_check
      _
    $region3: #{tpu_custom_call.1} parent=1 // pred_check_branch
      %14 = sbr.rel (0) target = $region5
    $region4: #{tpu_custom_call.1} parent=1 // pred_region
      %s16 = ssub.s32 512, 512
      %17 = vsyncadd [#allocation3], %s16
      %s18 = sshll.u32 [#allocation2], 4
      %s19 = int_to_ptr.vmem [resolvable:$true] %s18
      %24 = dma.hbm_to_vmem [thread:$0]  %s0, 512, %s19, [#allocation3], 128, 128, 8
    $region5: #{tpu_custom_call.1} parent=1 // pred_fallthru
      _
    // Predicated region
    $region6: #{tpu_custom_call.1} parent=1 // pred_check
      _
    $region7: #{tpu_custom_call.1} parent=1 // pred_check_branch
      %26 = sbr.rel (0) target = $region9
    $region8: #{tpu_custom_call.1} parent=1 // pred_region
      _
    $region9: #{tpu_custom_call.1} parent=1 // pred_fallthru
      _
    // Predicated region
    $region10: #{tpu_custom_call.1} parent=1 // pred_check
      _
    $region11: #{tpu_custom_call.1} parent=1 // pred_check_branch
      %28 = sbr.rel (0) target = $region13
    $region12: #{tpu_custom_call.1} parent=1 // pred_region
      _
    $region13: #{tpu_custom_call.1} parent=1 // pred_fallthru
      _
    // Predicated region
    $region14: #{tpu_custom_call.1} parent=1 // pred_check
      _
    $region15: #{tpu_custom_call.1} parent=1 // pred_check_branch
      %30 = sbr.rel (0) target = $region17
    $region16: #{tpu_custom_call.1} parent=1 // pred_region
      %s32 = ssub.s32 6144, 6144
      %33 = vsyncadd [#allocation6], %s32
      %s34 = sshll.u32 [#allocation5], 4
      %s35 = int_to_ptr.vmem [resolvable:$true] %s34
      %40 = dma.hbm_to_vmem [thread:$0]  %s3, 6144, %s35, [#allocation6], 384, 384, 24
    $region17: #{tpu_custom_call.1} parent=1 // pred_fallthru
      _
    // Predicated region
    $region18: #{tpu_custom_call.1} parent=1 // pred_check
      _
    $region19: #{tpu_custom_call.1} parent=1 // pred_check_branch
      %42 = sbr.rel (0) target = $region21
    $region20: #{tpu_custom_call.1} parent=1 // pred_region
      _
    $region21: #{tpu_custom_call.1} parent=1 // pred_fallthru
      _
    // Predicated region
    $region22: #{tpu_custom_call.1} parent=1 // pred_check
      _
    $region23: #{tpu_custom_call.1} parent=1 // pred_check_branch
      %44 = sbr.rel (0) target = $region25
    $region24: #{tpu_custom_call.1} parent=1 // pred_region
      %45 = dma.done [#allocation3], 512
    $region25: #{tpu_custom_call.1} parent=1 // pred_fallthru
      _
    // Predicated region
    $region26: #{tpu_custom_call.1} parent=1 // pred_check
      _
    $region27: #{tpu_custom_call.1} parent=1 // pred_check_branch
      %47 = sbr.rel (0) target = $region29
    $region28: #{tpu_custom_call.1} parent=1 // pred_region
      %48 = dma.done [#allocation6], 6144
    $region29: #{tpu_custom_call.1} parent=1 // pred_fallthru
      _
    %v49 = vld [vmem:[#allocation2] sm:$0xff]
    %v50 = vld [vmem:[#allocation2 + $0x8] sm:$0xff]
    %v51 = vld [vmem:[#allocation2 + $0x10] sm:$0xff]
    %v52 = vld [vmem:[#allocation2 + $0x18] sm:$0xff]
    %53 = vadd.xlane.f32.xlu0 %v49
    %v54 = vpop.xlane.xlu0 %53
    %55 = vadd.xlane.f32.xlu0 %v50
    %v56 = vpop.xlane.xlu0 %55
    %57 = vadd.xlane.f32.xlu0 %v51
    %v58 = vpop.xlane.xlu0 %57
    %59 = vadd.xlane.f32.xlu0 %v52
    %v60 = vpop.xlane.xlu0 %59
    %v61 = vrcp.pop 128.0
    %v62 = vmul.f32 %v54, %v61
    %v63 = vmul.f32 %v56, %v61
    %v64 = vmul.f32 %v58, %v61
    %v65 = vmul.f32 %v60, %v61
    %v66 = vsub.f32 %v49, %v62
    %v67 = vsub.f32 %v50, %v63
    %v68 = vsub.f32 %v51, %v64
    %v69 = vsub.f32 %v52, %v65
    %v70 = vmul.f32 %v66, %v66
    %v71 = vmul.f32 %v67, %v67
    %v72 = vmul.f32 %v68, %v68
    %v73 = vmul.f32 %v69, %v69
    %74 = vadd.xlane.f32.xlu0 %v70
    %v75 = vpop.xlane.xlu0 %74
    %76 = vadd.xlane.f32.xlu0 %v71
    %v77 = vpop.xlane.xlu0 %76
    %78 = vadd.xlane.f32.xlu0 %v72
    %v79 = vpop.xlane.xlu0 %78
    %80 = vadd.xlane.f32.xlu0 %v73
    %v81 = vpop.xlane.xlu0 %80
    %v82 = vmul.f32 %v75, %v61
    %v83 = vmul.f32 %v77, %v61
    %v84 = vmul.f32 %v79, %v61
    %v85 = vmul.f32 %v81, %v61
    %v86 = vadd.f32 %v82, 1e-05
    %v87 = vadd.f32 %v83, 1e-05
    %v88 = vadd.f32 %v84, 1e-05
    %v89 = vadd.f32 %v85, 1e-05
    %v90 = vrsqrt.pop %v86
    %v91 = vrsqrt.pop %v87
    %v92 = vrsqrt.pop %v88
    %v93 = vrsqrt.pop %v89
    %v94 = vmul.f32 %v66, %v90
    %v95 = vmul.f32 %v67, %v91
    %v96 = vmul.f32 %v68, %v92
    %v97 = vmul.f32 %v69, %v93
    %v98 = vld [vmem:[%s1] sm:$0x1]
    %v100 = vlaneseq
    %v101 = vshrl.u32 %v100, 7
    %v102 = vsub.s32 0, %v101
    %v103 = vrot.slane %v98, %v102
    %v105 = vmul.f32 %v94, %v103
    %v106 = vmul.f32 %v95, %v103
    %v107 = vmul.f32 %v96, %v103
    %v108 = vmul.f32 %v97, %v103
    %v109 = vld [vmem:[%s2] sm:$0x1]
    %v111 = vlaneseq
    %v112 = vshrl.u32 %v111, 7
    %v113 = vsub.s32 0, %v112
    %v114 = vrot.slane %v109, %v113
    %v116 = vadd.f32 %v105, %v114
    %v117 = vadd.f32 %v106, %v114
    %v118 = vadd.f32 %v107, %v114
    %v119 = vadd.f32 %v108, %v114
    %v120 = vld [vmem:[#allocation5] sm:$0xff]
    %v121 = vld [vmem:[#allocation5 + $0x8] sm:$0xff]
    %v122 = vld [vmem:[#allocation5 + $0x10] sm:$0xff]
    %v123 = vld [vmem:[#allocation5 + $0x18] sm:$0xff]
    %v124 = vld [vmem:[#allocation5 + $0x20] sm:$0xff]
    %v125 = vld [vmem:[#allocation5 + $0x28] sm:$0xff]
    %v126 = vld [vmem:[#allocation5 + $0x30] sm:$0xff]
    %v127 = vld [vmem:[#allocation5 + $0x38] sm:$0xff]
    %v128 = vld [vmem:[#allocation5 + $0x40] sm:$0xff]
    %v129 = vld [vmem:[#allocation5 + $0x48] sm:$0xff]
    %v130 = vld [vmem:[#allocation5 + $0x50] sm:$0xff]
    %v131 = vld [vmem:[#allocation5 + $0x58] sm:$0xff]
    %v132 = vld [vmem:[#allocation5 + $0x60] sm:$0xff]
    %v133 = vld [vmem:[#allocation5 + $0x68] sm:$0xff]
    %v134 = vld [vmem:[#allocation5 + $0x70] sm:$0xff]
    %v135 = vld [vmem:[#allocation5 + $0x78] sm:$0xff]
    %v136 = vld [vmem:[#allocation5 + $0x80] sm:$0xff]
    %v137 = vld [vmem:[#allocation5 + $0x88] sm:$0xff]
    %v138 = vld [vmem:[#allocation5 + $0x90] sm:$0xff]
    %v139 = vld [vmem:[#allocation5 + $0x98] sm:$0xff]
    %v140 = vld [vmem:[#allocation5 + $0xa0] sm:$0xff]
    %v141 = vld [vmem:[#allocation5 + $0xa8] sm:$0xff]
    %v142 = vld [vmem:[#allocation5 + $0xb0] sm:$0xff]
    %v143 = vld [vmem:[#allocation5 + $0xb8] sm:$0xff]
    %v144 = vld [vmem:[#allocation5 + $0xc0] sm:$0xff]
    %v145 = vld [vmem:[#allocation5 + $0xc8] sm:$0xff]
    %v146 = vld [vmem:[#allocation5 + $0xd0] sm:$0xff]
    %v147 = vld [vmem:[#allocation5 + $0xd8] sm:$0xff]
    %v148 = vld [vmem:[#allocation5 + $0xe0] sm:$0xff]
    %v149 = vld [vmem:[#allocation5 + $0xe8] sm:$0xff]
    %v150 = vld [vmem:[#allocation5 + $0xf0] sm:$0xff]
    %v151 = vld [vmem:[#allocation5 + $0xf8] sm:$0xff]
    %v152 = vld [vmem:[#allocation5 + $0x100] sm:$0xff]
    %v153 = vld [vmem:[#allocation5 + $0x108] sm:$0xff]
    %v154 = vld [vmem:[#allocation5 + $0x110] sm:$0xff]
    %v155 = vld [vmem:[#allocation5 + $0x118] sm:$0xff]
    %v156 = vld [vmem:[#allocation5 + $0x120] sm:$0xff]
    %v157 = vld [vmem:[#allocation5 + $0x128] sm:$0xff]
    %v158 = vld [vmem:[#allocation5 + $0x130] sm:$0xff]
    %v159 = vld [vmem:[#allocation5 + $0x138] sm:$0xff]
    %v160 = vld [vmem:[#allocation5 + $0x140] sm:$0xff]
    %v161 = vld [vmem:[#allocation5 + $0x148] sm:$0xff]
    %v162 = vld [vmem:[#allocation5 + $0x150] sm:$0xff]
    %v163 = vld [vmem:[#allocation5 + $0x158] sm:$0xff]
    %v164 = vld [vmem:[#allocation5 + $0x160] sm:$0xff]
    %v165 = vld [vmem:[#allocation5 + $0x168] sm:$0xff]
    %v166 = vld [vmem:[#allocation5 + $0x170] sm:$0xff]
    %v167 = vld [vmem:[#allocation5 + $0x178] sm:$0xff]
    %v168 = vld [vmem:[%s4] sm:$0x7]
    %v170 = vlaneseq
    %v171 = vshrl.u32 %v170, 7
    %v172 = vsub.s32 0, %v171
    %v173 = vrot.slane %v168, %v172
    %v174 = vlaneseq
    %v175 = vshrl.u32 %v174, 7
    %v176 = vsub.s32 1, %v175
    %v177 = vrot.slane %v168, %v176
    %v178 = vlaneseq
    %v179 = vshrl.u32 %v178, 7
    %v180 = vsub.s32 2, %v179
    %v181 = vrot.slane %v168, %v180
    %185 = vmatprep.subr.mxu0 %v121
    %186 = vmatpush1.msra.mxu0 %v120
    %187 = vmatprep.subr.mxu0 %v124
    %188 = vmatpush1.msra.mxu0 %v123
    %189 = vmatprep.subr.mxu0 %v127
    %190 = vmatpush1.msra.mxu0 %v126
    %191 = vmatprep.subr.mxu0 %v130
    %192 = vmatpush1.msra.mxu0 %v129
    %193 = vmatprep.subr.mxu0 %v133
    %194 = vmatpush1.msra.mxu0 %v132
    %195 = vmatprep.subr.mxu0 %v136
    %196 = vmatpush1.msra.mxu0 %v135
    %197 = vmatprep.subr.mxu0 %v139
    %198 = vmatpush1.msra.mxu0 %v138
    %199 = vmatprep.subr.mxu0 %v142
    %200 = vmatpush1.msra.mxu0 %v141
    %201 = vmatprep.subr.mxu0 %v145
    %202 = vmatpush1.msra.mxu0 %v144
    %203 = vmatprep.subr.mxu0 %v148
    %204 = vmatpush1.msra.mxu0 %v147
    %205 = vmatprep.subr.mxu0 %v151
    %206 = vmatpush1.msra.mxu0 %v150
    %207 = vmatprep.subr.mxu0 %v154
    %208 = vmatpush1.msra.mxu0 %v153
    %209 = vmatprep.subr.mxu0 %v157
    %210 = vmatpush1.msra.mxu0 %v156
    %211 = vmatprep.subr.mxu0 %v160
    %212 = vmatpush1.msra.mxu0 %v159
    %213 = vmatprep.subr.mxu0 %v163
    %214 = vmatpush1.msra.mxu0 %v162
    %215 = vmatprep.subr.mxu0 %v166
    %216 = vmatpush1.msra.mxu0 %v165
    %217 = vmatprep.subr.mxu0 0.0
    %218 = vmatpush1.msra.mxu0 0.0
    %219 = vmatprep.subr.mxu0 0.0
    %220 = vmatpush1.msra.mxu0 0.0
    %221 = vmatprep.subr.mxu0 0.0
    %222 = vmatpush1.msra.mxu0 0.0
    %223 = vmatprep.subr.mxu0 0.0
    %224 = vmatpush1.msra.mxu0 0.0
    %225 = vmatprep.subr.mxu0 0.0
    %226 = vmatpush1.msra.mxu0 0.0
    %227 = vmatprep.subr.mxu0 0.0
    %228 = vmatpush1.msra.mxu0 0.0
    %229 = vmatprep.subr.mxu0 0.0
    %230 = vmatpush1.msra.mxu0 0.0
    %231 = vmatprep.subr.mxu0 0.0
    %232 = vmatpush1.msra.mxu0 0.0
    %233 = vmatprep.subr.mxu0 0.0
    %234 = vmatpush1.msra.mxu0 0.0
    %235 = vmatprep.subr.mxu0 0.0
    %236 = vmatpush1.msra.mxu0 0.0
    %237 = vmatprep.subr.mxu0 0.0
    %238 = vmatpush1.msra.mxu0 0.0
    %239 = vmatprep.subr.mxu0 0.0
    %240 = vmatpush1.msra.mxu0 0.0
    %241 = vmatprep.subr.mxu0 0.0
    %242 = vmatpush1.msra.mxu0 0.0
    %243 = vmatprep.subr.mxu0 0.0
    %244 = vmatpush1.msra.mxu0 0.0
    %245 = vmatprep.subr.mxu0 0.0
    %246 = vmatpush1.msra.mxu0 0.0
    %247 = vmatprep.subr.mxu0 0.0
    %248 = vmatpush1.msra.mxu0 0.0
    %249 = vmatprep.mubr.f32.mxu0 0.0
    %250 = vmatmul.mubr.f32.gmra.mrb[0].mxu0 %v116
    %v251 = vpop.f32.mrb[0].mxu0
    %v252 = vadd.f32 %v173, %v251
    %v253 = vpop.f32.mrb[0].mxu0
    %v254 = vadd.f32 %v177, %v253
    %255 = vmatprep.mubr.f32.mxu0 0.0
    %256 = vmatmul.mubr.f32.gmra.mrb[0].mxu0 %v117
    %v257 = vpop.f32.mrb[0].mxu0
    %v258 = vadd.f32 %v173, %v257
    %v259 = vpop.f32.mrb[0].mxu0
    %v260 = vadd.f32 %v177, %v259
    %261 = vmatprep.mubr.f32.mxu0 0.0
    %262 = vmatmul.mubr.f32.gmra.mrb[0].mxu0 %v118
    %v263 = vpop.f32.mrb[0].mxu0
    %v264 = vadd.f32 %v173, %v263
    %v265 = vpop.f32.mrb[0].mxu0
    %v266 = vadd.f32 %v177, %v265
    %267 = vmatprep.mubr.f32.mxu0 0.0
    %268 = vmatmul.mubr.f32.gmra.mrb[0].mxu0 %v119
    %v269 = vpop.f32.mrb[0].mxu0
    %v270 = vadd.f32 %v173, %v269
    %v271 = vpop.f32.mrb[0].mxu0
    %v272 = vadd.f32 %v177, %v271
    %273 = vdwg.mxu0
    %274 = vmatprep.subr.mxu0 0.0
    %275 = vmatpush1.msra.mxu0 %v122
    %276 = vmatprep.subr.mxu0 0.0
    %277 = vmatpush1.msra.mxu0 %v125
    %278 = vmatprep.subr.mxu0 0.0
    %279 = vmatpush1.msra.mxu0 %v128
    %280 = vmatprep.subr.mxu0 0.0
    %281 = vmatpush1.msra.mxu0 %v131
    %282 = vmatprep.subr.mxu0 0.0
    %283 = vmatpush1.msra.mxu0 %v134
    %284 = vmatprep.subr.mxu0 0.0
    %285 = vmatpush1.msra.mxu0 %v137
    %286 = vmatprep.subr.mxu0 0.0
    %287 = vmatpush1.msra.mxu0 %v140
    %288 = vmatprep.subr.mxu0 0.0
    %289 = vmatpush1.msra.mxu0 %v143
    %290 = vmatprep.subr.mxu0 0.0
    %291 = vmatpush1.msra.mxu0 %v146
    %292 = vmatprep.subr.mxu0 0.0
    %293 = vmatpush1.msra.mxu0 %v149
    %294 = vmatprep.subr.mxu0 0.0
    %295 = vmatpush1.msra.mxu0 %v152
    %296 = vmatprep.subr.mxu0 0.0
    %297 = vmatpush1.msra.mxu0 %v155
    %298 = vmatprep.subr.mxu0 0.0
    %299 = vmatpush1.msra.mxu0 %v158
    %300 = vmatprep.subr.mxu0 0.0
    %301 = vmatpush1.msra.mxu0 %v161
    %302 = vmatprep.subr.mxu0 0.0
    %303 = vmatpush1.msra.mxu0 %v164
    %304 = vmatprep.subr.mxu0 0.0
    %305 = vmatpush1.msra.mxu0 %v167
    %306 = vmatprep.subr.mxu0 0.0
    %307 = vmatpush1.msra.mxu0 0.0
    %308 = vmatprep.subr.mxu0 0.0
    %309 = vmatpush1.msra.mxu0 0.0
    %310 = vmatprep.subr.mxu0 0.0
    %311 = vmatpush1.msra.mxu0 0.0
    %312 = vmatprep.subr.mxu0 0.0
    %313 = vmatpush1.msra.mxu0 0.0
    %314 = vmatprep.subr.mxu0 0.0
    %315 = vmatpush1.msra.mxu0 0.0
    %316 = vmatprep.subr.mxu0 0.0
    %317 = vmatpush1.msra.mxu0 0.0
    %318 = vmatprep.subr.mxu0 0.0
    %319 = vmatpush1.msra.mxu0 0.0
    %320 = vmatprep.subr.mxu0 0.0
    %321 = vmatpush1.msra.mxu0 0.0
    %322 = vmatprep.subr.mxu0 0.0
    %323 = vmatpush1.msra.mxu0 0.0
    %324 = vmatprep.subr.mxu0 0.0
    %325 = vmatpush1.msra.mxu0 0.0
    %326 = vmatprep.subr.mxu0 0.0
    %327 = vmatpush1.msra.mxu0 0.0
    %328 = vmatprep.subr.mxu0 0.0
    %329 = vmatpush1.msra.mxu0 0.0
    %330 = vmatprep.subr.mxu0 0.0
    %331 = vmatpush1.msra.mxu0 0.0
    %332 = vmatprep.subr.mxu0 0.0
    %333 = vmatpush1.msra.mxu0 0.0
    %334 = vmatprep.subr.mxu0 0.0
    %335 = vmatpush1.msra.mxu0 0.0
    %336 = vmatprep.subr.mxu0 0.0
    %337 = vmatpush1.msra.mxu0 0.0
    %338 = vmatprep.mubr.f32.mxu0 0.0
    %339 = vmatmul.mubr.f32.gmra.mrb[0].mxu0 %v116
    %v340 = vpop.f32.mrb[0].mxu0
    %v341 = vadd.f32 %v181, %v340
    %v342 = vpop.f32.mrb[0].mxu0
    %343 = vmatprep.mubr.f32.mxu0 0.0
    %344 = vmatmul.mubr.f32.gmra.mrb[0].mxu0 %v117
    %v345 = vpop.f32.mrb[0].mxu0
    %v346 = vadd.f32 %v181, %v345
    %v347 = vpop.f32.mrb[0].mxu0
    %348 = vmatprep.mubr.f32.mxu0 0.0
    %349 = vmatmul.mubr.f32.gmra.mrb[0].mxu0 %v118
    %v350 = vpop.f32.mrb[0].mxu0
    %v351 = vadd.f32 %v181, %v350
    %v352 = vpop.f32.mrb[0].mxu0
    %353 = vmatprep.mubr.f32.mxu0 0.0
    %354 = vmatmul.mubr.f32.gmra.mrb[0].mxu0 %v119
    %v355 = vpop.f32.mrb[0].mxu0
    %v356 = vadd.f32 %v181, %v355
    %v357 = vpop.f32.mrb[0].mxu0
    %358 = vdwg.mxu0
    %359 = vst [vmem:[#allocation7] sm:$0xff] %v252
    %360 = vst [vmem:[#allocation7 + $0x8] sm:$0xff] %v254
    %361 = vst [vmem:[#allocation7 + $0x10] sm:$0xff] %v341
    %362 = vst [vmem:[#allocation7 + $0x18] sm:$0xff] %v258
    %363 = vst [vmem:[#allocation7 + $0x20] sm:$0xff] %v260
    %364 = vst [vmem:[#allocation7 + $0x28] sm:$0xff] %v346
    %365 = vst [vmem:[#allocation7 + $0x30] sm:$0xff] %v264
    %366 = vst [vmem:[#allocation7 + $0x38] sm:$0xff] %v266
    %367 = vst [vmem:[#allocation7 + $0x40] sm:$0xff] %v351
    %368 = vst [vmem:[#allocation7 + $0x48] sm:$0xff] %v270
    %369 = vst [vmem:[#allocation7 + $0x50] sm:$0xff] %v272
    %370 = vst [vmem:[#allocation7 + $0x58] sm:$0xff] %v356
    // Predicated region
    $region30: #{tpu_custom_call.1} parent=1 // pred_check
      _
    $region31: #{tpu_custom_call.1} parent=1 // pred_check_branch
      %372 = sbr.rel (0) target = $region33
    $region32: #{tpu_custom_call.1} parent=1 // pred_region
      %s374 = ssub.s32 1536, 1536
      %375 = vsyncadd [#allocation4], %s374
      %s376 = sshll.u32 [#allocation7], 4
      %s377 = int_to_ptr.vmem [resolvable:$true] %s376
      %382 = dma.vmem_to_hbm [thread:$0]  %s377, 1536, %s5, [#allocation4], 384, 384, 24
    $region33: #{tpu_custom_call.1} parent=1 // pred_fallthru
      _
    // Predicated region
    $region34: #{tpu_custom_call.1} parent=1 // pred_check
      _
    $region35: #{tpu_custom_call.1} parent=1 // pred_check_branch
      %384 = sbr.rel (0) target = $region37
    $region36: #{tpu_custom_call.1} parent=1 // pred_region
      %385 = dma.done [#allocation4], 1536
    $region37: #{tpu_custom_call.1} parent=1 // pred_fallthru
      _
    %386 = vsyncpa [#allocation3], 1
    %387 = vsyncpa [#allocation6], 1
    %388 = vsyncpa [#allocation4], 1

</llo_original>
